<compile_context>
chip_gen: v7x
topology: tpu7x:2x2x1
jax: 0.10.0
libtpu: 0.0.40
codegen_flags: <defaults>
</compile_context>

<pallas_src>
import jax
import jax.numpy as jnp
from jax.experimental import pallas as pl
from jax.experimental.pallas import tpu as pltpu

C1 = 16    # conv1 out channels
C2 = 32    # conv2 out channels
HID = 64   # fc1 hidden size


def cnn_regressor_kernel(x_ref, w1_ref, b1_ref, w2_ref, b2_ref,
                         wf1_ref, bf1_ref, wf2_ref, bf2_ref, out_ref):
    # Feature-major: activations are (features, TB); batch fills the lane axis.
    mm_dtype = w1_ref.dtype
    x = x_ref[...]                                            # (L*Cin, TB)
    h1 = jnp.maximum(
        jnp.dot(w1_ref[...], x, preferred_element_type=jnp.float32)
        + b1_ref[...], 0.0)                                   # (L*16, TB) f32
    h2 = jnp.maximum(
        jnp.dot(w2_ref[...], h1.astype(mm_dtype),
                preferred_element_type=jnp.float32)
        + b2_ref[...], 0.0)                                   # (L*32, TB) f32
    f1 = jnp.maximum(
        jnp.dot(wf1_ref[...], h2.astype(mm_dtype),
                preferred_element_type=jnp.float32)
        + bf1_ref[...], 0.0)                                  # (64, TB)  f32
    # fc2 has N=1 -> keep it off the MXU: VPU multiply + sublane reduction.
    out_ref[...] = (jnp.sum(f1 * wf2_ref[...], axis=0, keepdims=True)
                    + bf2_ref[...])                           # (1, TB)


def _round_up(a, m):
    return ((a + m - 1) // m) * m


def _banded_conv_weight(w, L):
    """Torch Conv1d weight (Cout, Cin, 3) -> banded (L*Cin, L*Cout) matrix so
    that x_flat(B, L*Cin) @ W reproduces conv1d(kernel=3, padding=1) with
    l-major, channel-minor indexing (column index = l*Cout + o).  Zero padding
    at the sequence boundaries is encoded by the missing band entries."""
    Cout, Cin, K = w.shape
    wk = jnp.transpose(w, (2, 1, 0)).astype(jnp.float32)      # (3, Cin, Cout)
    big = jnp.zeros((L * Cin, L * Cout), jnp.float32)
    for l in range(L):
        for k in range(K):
            lp = l + k - 1                  # input position feeding output l
            if 0 <= lp < L:
                big = big.at[lp * Cin:(lp + 1) * Cin,
                             l * Cout:(l + 1) * Cout].set(wk[k])
    return big


def pack_params(params, L, use_bf16=False):
    """One-time parameter re-packing (do NOT call per forward)."""
    w1, b1, w2, b2, wf1, bf1, wf2, bf2 = params
    mm_dtype = jnp.bfloat16 if use_bf16 else jnp.float32
    # feature-major (transposed banded) conv weights
    w1t = _banded_conv_weight(w1, L).T.astype(mm_dtype)       # (L*16, L*Cin)
    w2t = _banded_conv_weight(w2, L).T.astype(mm_dtype)       # (L*32, L*16)
    b1c = jnp.tile(b1.astype(jnp.float32), (L,)).reshape(L * C1, 1)
    b2c = jnp.tile(b2.astype(jnp.float32), (L,)).reshape(L * C2, 1)
    # torch fc1 weight (64, 32*L), feature index c*L + l  ->  columns l*32 + c
    wf1t = (jnp.transpose(wf1.astype(jnp.float32).reshape(HID, C2, L),
                          (0, 2, 1)).reshape(HID, L * C2).astype(mm_dtype))
    bf1c = bf1.astype(jnp.float32).reshape(HID, 1)
    wf2c = wf2.astype(jnp.float32).reshape(1, HID).T          # (64, 1) VPU path
    bf2c = bf2.astype(jnp.float32).reshape(1, 1)
    return (w1t, b1c, w2t, b2c, wf1t, bf1c, wf2c, bf2c)


def _choose_tb(B, tb_max):
    """Lane-aligned batch tile (multiple of 128); >=2 grid steps when the batch
    allows it so v7x's second TensorCore isn't idle.  (Use tb_max≈256 on v5e.)"""
    b128 = _round_up(B, 128)
    if b128 >= 256:
        tb = min(tb_max, max(128, (b128 // 2) // 128 * 128))
    else:
        tb = b128
    return tb


def cnn_regressor_forward(x, packed, tb_max=512):
    """x: (B, C_in, L) float32 (PyTorch NCL). `packed` from pack_params().
    Returns (B, 1) float32."""
    w1t, b1c, w2t, b2c, wf1t, bf1c, wf2c, bf2c = packed
    B, Cin, L = x.shape
    mm_dtype = w1t.dtype

    # hot-path glue: feature-major x (row = l*Cin + c, col = batch) + lane pad
    x_t = jnp.transpose(x, (2, 1, 0)).reshape(L * Cin, B).astype(mm_dtype)
    TB = _choose_tb(B, tb_max)
    B_pad = _round_up(B, TB)
    if B_pad != B:
        x_t = jnp.pad(x_t, ((0, 0), (0, B_pad - B)))

    out = pl.pallas_call(
        cnn_regressor_kernel,
        out_shape=jax.ShapeDtypeStruct((1, B_pad), jnp.float32),
        grid_spec=pltpu.PrefetchScalarGridSpec(
            num_scalar_prefetch=0,
            grid=(B_pad // TB,),
            in_specs=[
                # x tile varies with the grid; weights/biases stay resident.
                pl.BlockSpec((L * Cin, TB), lambda i: (0, i)),
                pl.BlockSpec((L * C1, L * Cin), lambda i: (0, 0)),
                pl.BlockSpec((L * C1, 1), lambda i: (0, 0)),
                pl.BlockSpec((L * C2, L * C1), lambda i: (0, 0)),
                pl.BlockSpec((L * C2, 1), lambda i: (0, 0)),
                pl.BlockSpec((HID, L * C2), lambda i: (0, 0)),
                pl.BlockSpec((HID, 1), lambda i: (0, 0)),
                pl.BlockSpec((HID, 1), lambda i: (0, 0)),
                pl.BlockSpec((1, 1), lambda i: (0, 0)),
            ],
            out_specs=pl.BlockSpec((1, TB), lambda i: (0, i)),
        ),
        compiler_params=pltpu.CompilerParams(
            dimension_semantics=("parallel",)),
    )(x_t, w1t, b1c, w2t, b2c, wf1t, bf1c, wf2c, bf2c)
    return out[0, :B][:, None]


def reference_forward(x, params):
    """Pure-JAX reference matching PyTorch CNNRegressor.forward semantics."""
    w1, b1, w2, b2, wf1, bf1, wf2, bf2 = params

    def conv1d(x, w, b):  # x (B,Cin,L), w (Cout,Cin,3), b (Cout,)
        B, Cin, L = x.shape
        xp = jnp.pad(x, ((0, 0), (0, 0), (1, 1)))
        out = jnp.zeros((B, w.shape[0], L), jnp.float32)
        for k in range(3):
            out = out + jnp.einsum('bcl,oc->bol', xp[:, :, k:k + L], w[:, :, k])
        return out + b[None, :, None]

    h1 = jax.nn.relu(conv1d(x, w1, b1))
    h2 = jax.nn.relu(conv1d(h1, w2, b2))
    flat = h2.reshape(x.shape[0], -1)
    f1 = jax.nn.relu(flat @ wf1.T + bf1)
    return f1 @ wf2.T + bf2


if __name__ == "__main__":
    B, Cin, L = 2, 4, 8          # small shapes consistent with the module

    key = jax.random.PRNGKey(0)
    ks = jax.random.split(key, 9)
    # deterministic synthetic parameters (PyTorch __init__ shapes)
    w1 = 0.1 * jax.random.normal(ks[0], (C1, Cin, 3), jnp.float32)
    b1 = 0.1 * jax.random.normal(ks[1], (C1,), jnp.float32)
    w2 = 0.1 * jax.random.normal(ks[2], (C2, C1, 3), jnp.float32)
    b2 = 0.1 * jax.random.normal(ks[3], (C2,), jnp.float32)
    wf1 = 0.1 * jax.random.normal(ks[4], (HID, C2 * L), jnp.float32)
    bf1 = 0.1 * jax.random.normal(ks[5], (HID,), jnp.float32)
    wf2 = 0.1 * jax.random.normal(ks[6], (1, HID), jnp.float32)
    bf2 = 0.1 * jax.random.normal(ks[7], (1,), jnp.float32)
    params = (w1, b1, w2, b2, wf1, bf1, wf2, bf2)

    x = jax.random.normal(ks[8], (B, Cin, L), jnp.float32)

    packed = pack_params(params, L, use_bf16=False)   # one-time re-packing
    out = jax.block_until_ready(cnn_regressor_forward(x, packed))
    ref = jax.block_until_ready(reference_forward(x, params))

    assert out.shape == (B, 1)
    assert jnp.allclose(out, ref, rtol=1e-4, atol=1e-4), (out, ref)
    print("KERNEL_OK")
</pallas_src>

<mosaic_0001>
module attributes {stable_mosaic.version = 11 : i64} {
  func.func @cnn_regressor_kernel(%arg0: i32, %arg1: memref<32x128xf32, #tpu.memory_space<vmem>>, %arg2: memref<128x32xf32, #tpu.memory_space<vmem>>, %arg3: memref<128x1xf32, #tpu.memory_space<vmem>>, %arg4: memref<256x128xf32, #tpu.memory_space<vmem>>, %arg5: memref<256x1xf32, #tpu.memory_space<vmem>>, %arg6: memref<64x256xf32, #tpu.memory_space<vmem>>, %arg7: memref<64x1xf32, #tpu.memory_space<vmem>>, %arg8: memref<64x1xf32, #tpu.memory_space<vmem>>, %arg9: memref<1x1xf32, #tpu.memory_space<vmem>>, %arg10: memref<1x128xf32, #tpu.memory_space<vmem>>) attributes {dimension_semantics = [#tpu.dimension_semantics<parallel>], iteration_bounds = array<i64: 1>, scalar_prefetch = 0 : i64, scratch_operands = 0 : i64, tpu.core_type = #tpu.core_type<tc>, window_params = [{transform_indices = @transform_0, window_bounds = array<i64: 32, 128>}, {pipeline_mode = #tpu.pipeline_mode<synchronous>, transform_indices = @transform_1, window_bounds = array<i64: 128, 32>}, {pipeline_mode = #tpu.pipeline_mode<synchronous>, transform_indices = @transform_2, window_bounds = array<i64: 128, 1>}, {pipeline_mode = #tpu.pipeline_mode<synchronous>, transform_indices = @transform_3, window_bounds = array<i64: 256, 128>}, {pipeline_mode = #tpu.pipeline_mode<synchronous>, transform_indices = @transform_4, window_bounds = array<i64: 256, 1>}, {pipeline_mode = #tpu.pipeline_mode<synchronous>, transform_indices = @transform_5, window_bounds = array<i64: 64, 256>}, {pipeline_mode = #tpu.pipeline_mode<synchronous>, transform_indices = @transform_6, window_bounds = array<i64: 64, 1>}, {pipeline_mode = #tpu.pipeline_mode<synchronous>, transform_indices = @transform_7, window_bounds = array<i64: 64, 1>}, {pipeline_mode = #tpu.pipeline_mode<synchronous>, transform_indices = @transform_8, window_bounds = array<i64: 1, 1>}, {transform_indices = @transform_9, window_bounds = array<i64: 1, 128>}]} {
    %c0 = arith.constant 0 : index
    %c0_0 = arith.constant 0 : index
    %0 = vector.load %arg1[%c0, %c0_0] : memref<32x128xf32, #tpu.memory_space<vmem>>, vector<32x128xf32>
    %c0_1 = arith.constant 0 : index
    %c0_2 = arith.constant 0 : index
    %1 = vector.load %arg2[%c0_1, %c0_2] : memref<128x32xf32, #tpu.memory_space<vmem>>, vector<128x32xf32>
    %cst = arith.constant dense<0.000000e+00> : vector<128x128xf32>
    %2 = tpu.matmul %1, %0, %cst {dimension_numbers = #tpu.dot_dimension_numbers<[1], [0], [0], [1], [0, 0, 1, 1], [], []>} : vector<128x32xf32>, vector<32x128xf32>, vector<128x128xf32> -> vector<128x128xf32>
    %c0_3 = arith.constant 0 : index
    %c0_4 = arith.constant 0 : index
    %3 = vector.load %arg3[%c0_3, %c0_4] : memref<128x1xf32, #tpu.memory_space<vmem>>, vector<128x1xf32>
    %4 = vector.broadcast %3 : vector<128x1xf32> to vector<128x128xf32>
    %5 = arith.addf %2, %4 : vector<128x128xf32>
    %cst_5 = arith.constant 0.000000e+00 : f32
    %6 = vector.broadcast %cst_5 : f32 to vector<128x128xf32>
    %7 = arith.maximumf %5, %6 : vector<128x128xf32>
    %c0_6 = arith.constant 0 : index
    %c0_7 = arith.constant 0 : index
    %8 = vector.load %arg4[%c0_6, %c0_7] : memref<256x128xf32, #tpu.memory_space<vmem>>, vector<256x128xf32>
    %cst_8 = arith.constant dense<0.000000e+00> : vector<256x128xf32>
    %9 = tpu.matmul %8, %7, %cst_8 {dimension_numbers = #tpu.dot_dimension_numbers<[1], [0], [0], [1], [0, 0, 1, 1], [], []>} : vector<256x128xf32>, vector<128x128xf32>, vector<256x128xf32> -> vector<256x128xf32>
    %c0_9 = arith.constant 0 : index
    %c0_10 = arith.constant 0 : index
    %10 = vector.load %arg5[%c0_9, %c0_10] : memref<256x1xf32, #tpu.memory_space<vmem>>, vector<256x1xf32>
    %11 = vector.broadcast %10 : vector<256x1xf32> to vector<256x128xf32>
    %12 = arith.addf %9, %11 : vector<256x128xf32>
    %cst_11 = arith.constant 0.000000e+00 : f32
    %13 = vector.broadcast %cst_11 : f32 to vector<256x128xf32>
    %14 = arith.maximumf %12, %13 : vector<256x128xf32>
    %c0_12 = arith.constant 0 : index
    %c0_13 = arith.constant 0 : index
    %15 = vector.load %arg6[%c0_12, %c0_13] : memref<64x256xf32, #tpu.memory_space<vmem>>, vector<64x256xf32>
    %cst_14 = arith.constant dense<0.000000e+00> : vector<64x128xf32>
    %16 = tpu.matmul %15, %14, %cst_14 {dimension_numbers = #tpu.dot_dimension_numbers<[1], [0], [0], [1], [0, 0, 1, 1], [], []>} : vector<64x256xf32>, vector<256x128xf32>, vector<64x128xf32> -> vector<64x128xf32>
    %c0_15 = arith.constant 0 : index
    %c0_16 = arith.constant 0 : index
    %17 = vector.load %arg7[%c0_15, %c0_16] : memref<64x1xf32, #tpu.memory_space<vmem>>, vector<64x1xf32>
    %18 = vector.broadcast %17 : vector<64x1xf32> to vector<64x128xf32>
    %19 = arith.addf %16, %18 : vector<64x128xf32>
    %cst_17 = arith.constant 0.000000e+00 : f32
    %20 = vector.broadcast %cst_17 : f32 to vector<64x128xf32>
    %21 = arith.maximumf %19, %20 : vector<64x128xf32>
    %c0_18 = arith.constant 0 : index
    %c0_19 = arith.constant 0 : index
    %22 = vector.load %arg8[%c0_18, %c0_19] : memref<64x1xf32, #tpu.memory_space<vmem>>, vector<64x1xf32>
    %23 = vector.broadcast %22 : vector<64x1xf32> to vector<64x128xf32>
    %24 = arith.mulf %21, %23 : vector<64x128xf32>
    %cst_20 = arith.constant dense<0.000000e+00> : vector<128xf32>
    %25 = vector.multi_reduction <add>, %24, %cst_20 [0] : vector<64x128xf32> to vector<128xf32>
    %26 = vector.shape_cast %25 : vector<128xf32> to vector<1x128xf32>
    %c0_21 = arith.constant 0 : index
    %c0_22 = arith.constant 0 : index
    %27 = vector.load %arg9[%c0_21, %c0_22] : memref<1x1xf32, #tpu.memory_space<vmem>>, vector<1x1xf32>
    %28 = vector.broadcast %27 : vector<1x1xf32> to vector<1x128xf32>
    %29 = arith.addf %26, %28 : vector<1x128xf32>
    %c0_23 = arith.constant 0 : index
    %c0_24 = arith.constant 0 : index
    %30 = vector.load %arg10[%c0_23, %c0_24] : memref<1x128xf32, #tpu.memory_space<vmem>>, vector<1x128xf32>
    tpu.vector_store %arg10[%c0_23, %c0_24], %29 {strides = array<i32>} : memref<1x128xf32, #tpu.memory_space<vmem>>, vector<1x128xf32>,
    return
  }
  func.func @transform_0(%arg0: i32) -> (i32, i32) {
    %c0_i32 = arith.constant 0 : i32
    %c0_i32_0 = arith.constant 0 : i32
    return %c0_i32, %arg0 : i32, i32
  }
  func.func @transform_1(%arg0: i32) -> (i32, i32) {
    %c0_i32 = arith.constant 0 : i32
    %c0_i32_0 = arith.constant 0 : i32
    %c0_i32_1 = arith.constant 0 : i32
    return %c0_i32, %c0_i32_0 : i32, i32
  }
  func.func @transform_2(%arg0: i32) -> (i32, i32) {
    %c0_i32 = arith.constant 0 : i32
    %c0_i32_0 = arith.constant 0 : i32
    %c0_i32_1 = arith.constant 0 : i32
    return %c0_i32, %c0_i32_0 : i32, i32
  }
  func.func @transform_3(%arg0: i32) -> (i32, i32) {
    %c0_i32 = arith.constant 0 : i32
    %c0_i32_0 = arith.constant 0 : i32
    %c0_i32_1 = arith.constant 0 : i32
    return %c0_i32, %c0_i32_0 : i32, i32
  }
  func.func @transform_4(%arg0: i32) -> (i32, i32) {
    %c0_i32 = arith.constant 0 : i32
    %c0_i32_0 = arith.constant 0 : i32
    %c0_i32_1 = arith.constant 0 : i32
    return %c0_i32, %c0_i32_0 : i32, i32
  }
  func.func @transform_5(%arg0: i32) -> (i32, i32) {
    %c0_i32 = arith.constant 0 : i32
    %c0_i32_0 = arith.constant 0 : i32
    %c0_i32_1 = arith.constant 0 : i32
    return %c0_i32, %c0_i32_0 : i32, i32
  }
  func.func @transform_6(%arg0: i32) -> (i32, i32) {
    %c0_i32 = arith.constant 0 : i32
    %c0_i32_0 = arith.constant 0 : i32
    %c0_i32_1 = arith.constant 0 : i32
    return %c0_i32, %c0_i32_0 : i32, i32
  }
  func.func @transform_7(%arg0: i32) -> (i32, i32) {
    %c0_i32 = arith.constant 0 : i32
    %c0_i32_0 = arith.constant 0 : i32
    %c0_i32_1 = arith.constant 0 : i32
    return %c0_i32, %c0_i32_0 : i32, i32
  }
  func.func @transform_8(%arg0: i32) -> (i32, i32) {
    %c0_i32 = arith.constant 0 : i32
    %c0_i32_0 = arith.constant 0 : i32
    %c0_i32_1 = arith.constant 0 : i32
    return %c0_i32, %c0_i32_0 : i32, i32
  }
  func.func @transform_9(%arg0: i32) -> (i32, i32) {
    %c0_i32 = arith.constant 0 : i32
    %c0_i32_0 = arith.constant 0 : i32
    return %c0_i32, %arg0 : i32, i32
  }
}

</mosaic_0001>

<llo_original>
// kernel: tpu_custom_call.1
$region0: #{tpu_custom_call.1}
  #allocation0 [shape = 'u32[]', space=smem, size = 0x4, offset = 0x4, fixed_abs, tag = 'smem constant byte address 0x4 - core index']
  #allocation1 [shape = 'u32[144,128]{1,0:T(1,128)}', space=vmem, size = 0x12000, scoped, tag = 'internal scratch']
  #allocation2 [shape = 'f32[1,1]{1,0:T(1,128)S(1)}', space=vmem, size = 0x200, scoped, tag = 'scoped memory for tpu_custom_call.1']
  %s0 = inlined_call_operand.vmem [shape: f32[32,128], index: 0, kind: input, shape index: {}]
  %s1 = inlined_call_operand.vmem [shape: f32[128,32], index: 1, kind: input, shape index: {}]
  %s2 = inlined_call_operand.vmem [shape: f32[128,1], index: 2, kind: input, shape index: {}]
  %s3 = inlined_call_operand.vmem [shape: f32[256,128], index: 3, kind: input, shape index: {}]
  %s4 = inlined_call_operand.vmem [shape: f32[256,1], index: 4, kind: input, shape index: {}]
  %s5 = inlined_call_operand.vmem [shape: f32[64,256], index: 5, kind: input, shape index: {}]
  %s6 = inlined_call_operand.vmem [shape: f32[64,1], index: 6, kind: input, shape index: {}]
  %s7 = inlined_call_operand.vmem [shape: f32[64,1], index: 7, kind: input, shape index: {}]
  %s8 = inlined_call_operand.<no memory space> [shape: f32[1,1], index: 8, kind: input, shape index: {}]
  %s9 = inlined_call_operand.hbm [shape: f32[1,128], index: 9, kind: output, shape index: {}]
  %s10 = sld [smem:[#allocation0]]
  $region46: #{tpu_custom_call.1} parent=0
    _
  %s12 = ssub.s32 1, %s10
  %s13 = scalar_select 0, %s12, %s10
  %v14 = vstv %s8
  %15 = vst [vmem:[#allocation2] sm:$0x1] %v14
  $region1: #{tpu_custom_call.1} parent=0
    #allocation3 [shape = 'u8[512]{0}', space=vmem, size = 0x400, scoped, tag = 'output window, operand 0, single buffered']
    #allocation4 [shape = 's32[1]{0}', space=sflag, size = 0x4, scoped, tag = 'scoped memory for tpu_custom_call.1']
    %16 = vsyncpa [#allocation4], 0
    // Predicated region
    $region2: #{tpu_custom_call.1} parent=1 // pred_check
      _
    $region3: #{tpu_custom_call.1} parent=1 // pred_check_branch
      %18 = sbr.rel (0) target = $region5
    $region4: #{tpu_custom_call.1} parent=1 // pred_region
      _
    $region5: #{tpu_custom_call.1} parent=1 // pred_fallthru
      _
    // Predicated region
    $region6: #{tpu_custom_call.1} parent=1 // pred_check
      _
    $region7: #{tpu_custom_call.1} parent=1 // pred_check_branch
      %20 = sbr.rel (0) target = $region9
    $region8: #{tpu_custom_call.1} parent=1 // pred_region
      _
    $region9: #{tpu_custom_call.1} parent=1 // pred_fallthru
      _
    // Predicated region
    $region10: #{tpu_custom_call.1} parent=1 // pred_check
      _
    $region11: #{tpu_custom_call.1} parent=1 // pred_check_branch
      %22 = sbr.rel (0) target = $region13
    $region12: #{tpu_custom_call.1} parent=1 // pred_region
      _
    $region13: #{tpu_custom_call.1} parent=1 // pred_fallthru
      _
    // Predicated region
    $region14: #{tpu_custom_call.1} parent=1 // pred_check
      _
    $region15: #{tpu_custom_call.1} parent=1 // pred_check_branch
      %24 = sbr.rel (0) target = $region17
    $region16: #{tpu_custom_call.1} parent=1 // pred_region
      _
    $region17: #{tpu_custom_call.1} parent=1 // pred_fallthru
      _
    // Predicated region
    $region18: #{tpu_custom_call.1} parent=1 // pred_check
      _
    $region19: #{tpu_custom_call.1} parent=1 // pred_check_branch
      %26 = sbr.rel (0) target = $region21
    $region20: #{tpu_custom_call.1} parent=1 // pred_region
      _
    $region21: #{tpu_custom_call.1} parent=1 // pred_fallthru
      _
    // Predicated region
    $region22: #{tpu_custom_call.1} parent=1 // pred_check
      _
    $region23: #{tpu_custom_call.1} parent=1 // pred_check_branch
      %28 = sbr.rel (0) target = $region25
    $region24: #{tpu_custom_call.1} parent=1 // pred_region
      _
    $region25: #{tpu_custom_call.1} parent=1 // pred_fallthru
      _
    // Predicated region
    $region26: #{tpu_custom_call.1} parent=1 // pred_check
      _
    $region27: #{tpu_custom_call.1} parent=1 // pred_check_branch
      %30 = sbr.rel (0) target = $region29
    $region28: #{tpu_custom_call.1} parent=1 // pred_region
      _
    $region29: #{tpu_custom_call.1} parent=1 // pred_fallthru
      _
    // Predicated region
    $region30: #{tpu_custom_call.1} parent=1 // pred_check
      _
    $region31: #{tpu_custom_call.1} parent=1 // pred_check_branch
      %32 = sbr.rel (0) target = $region33
    $region32: #{tpu_custom_call.1} parent=1 // pred_region
      _
    $region33: #{tpu_custom_call.1} parent=1 // pred_fallthru
      _
    // Predicated region
    $region34: #{tpu_custom_call.1} parent=1 // pred_check
      _
    $region35: #{tpu_custom_call.1} parent=1 // pred_check_branch
      %34 = sbr.rel (0) target = $region37
    $region36: #{tpu_custom_call.1} parent=1 // pred_region
      _
    $region37: #{tpu_custom_call.1} parent=1 // pred_fallthru
      _
    %v35 = vld [vmem:[%s0] sm:$0xff]
    %v36 = vld [vmem:[%s0 + $0x8] sm:$0xff]
    %v37 = vld [vmem:[%s0 + $0x10] sm:$0xff]
    %v38 = vld [vmem:[%s0 + $0x18] sm:$0xff]
    %v39 = vld [vmem:[%s1] sm:$0xff]
    %v40 = vld [vmem:[%s1 + $0x8] sm:$0xff]
    %v41 = vld [vmem:[%s1 + $0x10] sm:$0xff]
    %v42 = vld [vmem:[%s1 + $0x18] sm:$0xff]
    %v43 = vld [vmem:[%s1 + $0x20] sm:$0xff]
    %v44 = vld [vmem:[%s1 + $0x28] sm:$0xff]
    %v45 = vld [vmem:[%s1 + $0x30] sm:$0xff]
    %v46 = vld [vmem:[%s1 + $0x38] sm:$0xff]
    %v47 = vld [vmem:[%s1 + $0x40] sm:$0xff]
    %v48 = vld [vmem:[%s1 + $0x48] sm:$0xff]
    %v49 = vld [vmem:[%s1 + $0x50] sm:$0xff]
    %v50 = vld [vmem:[%s1 + $0x58] sm:$0xff]
    %v51 = vld [vmem:[%s1 + $0x60] sm:$0xff]
    %v52 = vld [vmem:[%s1 + $0x68] sm:$0xff]
    %v53 = vld [vmem:[%s1 + $0x70] sm:$0xff]
    %v54 = vld [vmem:[%s1 + $0x78] sm:$0xff]
    %v55 = vld [vmem:[%s2] sm:$0xff]
    %v56 = vld [vmem:[%s2 + $0x8] sm:$0xff]
    %v57 = vld [vmem:[%s2 + $0x10] sm:$0xff]
    %v58 = vld [vmem:[%s2 + $0x18] sm:$0xff]
    %v59 = vld [vmem:[%s2 + $0x20] sm:$0xff]
    %v60 = vld [vmem:[%s2 + $0x28] sm:$0xff]
    %v61 = vld [vmem:[%s2 + $0x30] sm:$0xff]
    %v62 = vld [vmem:[%s2 + $0x38] sm:$0xff]
    %v63 = vld [vmem:[%s2 + $0x40] sm:$0xff]
    %v64 = vld [vmem:[%s2 + $0x48] sm:$0xff]
    %v65 = vld [vmem:[%s2 + $0x50] sm:$0xff]
    %v66 = vld [vmem:[%s2 + $0x58] sm:$0xff]
    %v67 = vld [vmem:[%s2 + $0x60] sm:$0xff]
    %v68 = vld [vmem:[%s2 + $0x68] sm:$0xff]
    %v69 = vld [vmem:[%s2 + $0x70] sm:$0xff]
    %v70 = vld [vmem:[%s2 + $0x78] sm:$0xff]
    %72 = vset.pattern.permute.xlu0 0
    %73 = vperm.xlu0 %72, %v55
    %v74 = vpop.permute.xlu0 %73
    %77 = vset.pattern.permute.xlu0 0
    %78 = vperm.xlu0 %77, %v56
    %v79 = vpop.permute.xlu0 %78
    %82 = vset.pattern.permute.xlu0 0
    %83 = vperm.xlu0 %82, %v57
    %v84 = vpop.permute.xlu0 %83
    %87 = vset.pattern.permute.xlu0 0
    %88 = vperm.xlu0 %87, %v58
    %v89 = vpop.permute.xlu0 %88
    %92 = vset.pattern.permute.xlu0 0
    %93 = vperm.xlu0 %92, %v59
    %v94 = vpop.permute.xlu0 %93
    %97 = vset.pattern.permute.xlu0 0
    %98 = vperm.xlu0 %97, %v60
    %v99 = vpop.permute.xlu0 %98
    %102 = vset.pattern.permute.xlu0 0
    %103 = vperm.xlu0 %102, %v61
    %v104 = vpop.permute.xlu0 %103
    %107 = vset.pattern.permute.xlu0 0
    %108 = vperm.xlu0 %107, %v62
    %v109 = vpop.permute.xlu0 %108
    %112 = vset.pattern.permute.xlu0 0
    %113 = vperm.xlu0 %112, %v63
    %v114 = vpop.permute.xlu0 %113
    %117 = vset.pattern.permute.xlu0 0
    %118 = vperm.xlu0 %117, %v64
    %v119 = vpop.permute.xlu0 %118
    %122 = vset.pattern.permute.xlu0 0
    %123 = vperm.xlu0 %122, %v65
    %v124 = vpop.permute.xlu0 %123
    %127 = vset.pattern.permute.xlu0 0
    %128 = vperm.xlu0 %127, %v66
    %v129 = vpop.permute.xlu0 %128
    %132 = vset.pattern.permute.xlu0 0
    %133 = vperm.xlu0 %132, %v67
    %v134 = vpop.permute.xlu0 %133
    %137 = vset.pattern.permute.xlu0 0
    %138 = vperm.xlu0 %137, %v68
    %v139 = vpop.permute.xlu0 %138
    %142 = vset.pattern.permute.xlu0 0
    %143 = vperm.xlu0 %142, %v69
    %v144 = vpop.permute.xlu0 %143
    %147 = vset.pattern.permute.xlu0 0
    %148 = vperm.xlu0 %147, %v70
    %v149 = vpop.permute.xlu0 %148
    %vm151 = vcmask 261120
    %v153 = vsel %vm151, %v39, 0
    %v156 = vsel %vm151, %v40, 0
    %v159 = vsel %vm151, %v41, 0
    %v162 = vsel %vm151, %v42, 0
    %v165 = vsel %vm151, %v43, 0
    %v168 = vsel %vm151, %v44, 0
    %v171 = vsel %vm151, %v45, 0
    %v174 = vsel %vm151, %v46, 0
    %v177 = vsel %vm151, %v47, 0
    %v180 = vsel %vm151, %v48, 0
    %v183 = vsel %vm151, %v49, 0
    %v186 = vsel %vm151, %v50, 0
    %v189 = vsel %vm151, %v51, 0
    %v192 = vsel %vm151, %v52, 0
    %v195 = vsel %vm151, %v53, 0
    %v198 = vsel %vm151, %v54, 0
    %200 = vmatprep.subr.mxu0 0.0
    %201 = vmatpush1.msra.mxu0 %v35
    %202 = vmatprep.subr.mxu0 0.0
    %203 = vmatpush1.msra.mxu0 %v36
    %204 = vmatprep.subr.mxu0 0.0
    %205 = vmatpush1.msra.mxu0 %v37
    %206 = vmatprep.subr.mxu0 0.0
    %207 = vmatpush1.msra.mxu0 %v38
    %208 = vmatprep.subr.mxu0 0.0
    %209 = vmatpush1.msra.mxu0 0.0
    %210 = vmatprep.subr.mxu0 0.0
    %211 = vmatpush1.msra.mxu0 0.0
    %212 = vmatprep.subr.mxu0 0.0
    %213 = vmatpush1.msra.mxu0 0.0
    %214 = vmatprep.subr.mxu0 0.0
    %215 = vmatpush1.msra.mxu0 0.0
    %216 = vmatprep.subr.mxu0 0.0
    %217 = vmatpush1.msra.mxu0 0.0
    %218 = vmatprep.subr.mxu0 0.0
    %219 = vmatpush1.msra.mxu0 0.0
    %220 = vmatprep.subr.mxu0 0.0
    %221 = vmatpush1.msra.mxu0 0.0
    %222 = vmatprep.subr.mxu0 0.0
    %223 = vmatpush1.msra.mxu0 0.0
    %224 = vmatprep.subr.mxu0 0.0
    %225 = vmatpush1.msra.mxu0 0.0
    %226 = vmatprep.subr.mxu0 0.0
    %227 = vmatpush1.msra.mxu0 0.0
    %228 = vmatprep.subr.mxu0 0.0
    %229 = vmatpush1.msra.mxu0 0.0
    %230 = vmatprep.subr.mxu0 0.0
    %231 = vmatpush1.msra.mxu0 0.0
    %232 = vmatprep.subr.mxu0 0.0
    %233 = vmatpush1.msra.mxu0 0.0
    %234 = vmatprep.subr.mxu0 0.0
    %235 = vmatpush1.msra.mxu0 0.0
    %236 = vmatprep.subr.mxu0 0.0
    %237 = vmatpush1.msra.mxu0 0.0
    %238 = vmatprep.subr.mxu0 0.0
    %239 = vmatpush1.msra.mxu0 0.0
    %240 = vmatprep.subr.mxu0 0.0
    %241 = vmatpush1.msra.mxu0 0.0
    %242 = vmatprep.subr.mxu0 0.0
    %243 = vmatpush1.msra.mxu0 0.0
    %244 = vmatprep.subr.mxu0 0.0
    %245 = vmatpush1.msra.mxu0 0.0
    %246 = vmatprep.subr.mxu0 0.0
    %247 = vmatpush1.msra.mxu0 0.0
    %248 = vmatprep.subr.mxu0 0.0
    %249 = vmatpush1.msra.mxu0 0.0
    %250 = vmatprep.subr.mxu0 0.0
    %251 = vmatpush1.msra.mxu0 0.0
    %252 = vmatprep.subr.mxu0 0.0
    %253 = vmatpush1.msra.mxu0 0.0
    %254 = vmatprep.subr.mxu0 0.0
    %255 = vmatpush1.msra.mxu0 0.0
    %256 = vmatprep.subr.mxu0 0.0
    %257 = vmatpush1.msra.mxu0 0.0
    %258 = vmatprep.subr.mxu0 0.0
    %259 = vmatpush1.msra.mxu0 0.0
    %260 = vmatprep.subr.mxu0 0.0
    %261 = vmatpush1.msra.mxu0 0.0
    %262 = vmatprep.subr.mxu0 0.0
    %263 = vmatpush1.msra.mxu0 0.0
    %264 = vmatprep.mubr.f32.mxu0 0.0
    %265 = vmatmul.mubr.f32.gmra.mrb[0].mxu0 %v153
    %v266 = vpop.f32.mrb[0].mxu0
    %v267 = vadd.f32 %v74, %v266
    %v268 = vpop.f32.mrb[0].mxu0
    %269 = vmatprep.mubr.f32.mxu0 0.0
    %270 = vmatmul.mubr.f32.gmra.mrb[0].mxu0 %v156
    %v271 = vpop.f32.mrb[0].mxu0
    %v272 = vadd.f32 %v79, %v271
    %v273 = vpop.f32.mrb[0].mxu0
    %274 = vmatprep.mubr.f32.mxu0 0.0
    %275 = vmatmul.mubr.f32.gmra.mrb[0].mxu0 %v159
    %v276 = vpop.f32.mrb[0].mxu0
    %v277 = vadd.f32 %v84, %v276
    %v278 = vpop.f32.mrb[0].mxu0
    %279 = vmatprep.mubr.f32.mxu0 0.0
    %280 = vmatmul.mubr.f32.gmra.mrb[0].mxu0 %v162
    %v281 = vpop.f32.mrb[0].mxu0
    %v282 = vadd.f32 %v89, %v281
    %v283 = vpop.f32.mrb[0].mxu0
    %284 = vmatprep.mubr.f32.mxu0 0.0
    %285 = vmatmul.mubr.f32.gmra.mrb[0].mxu0 %v165
    %v286 = vpop.f32.mrb[0].mxu0
    %v287 = vadd.f32 %v94, %v286
    %v288 = vpop.f32.mrb[0].mxu0
    %289 = vmatprep.mubr.f32.mxu0 0.0
    %290 = vmatmul.mubr.f32.gmra.mrb[0].mxu0 %v168
    %v291 = vpop.f32.mrb[0].mxu0
    %v292 = vadd.f32 %v99, %v291
    %v293 = vpop.f32.mrb[0].mxu0
    %294 = vmatprep.mubr.f32.mxu0 0.0
    %295 = vmatmul.mubr.f32.gmra.mrb[0].mxu0 %v171
    %v296 = vpop.f32.mrb[0].mxu0
    %v297 = vadd.f32 %v104, %v296
    %v298 = vpop.f32.mrb[0].mxu0
    %299 = vmatprep.mubr.f32.mxu0 0.0
    %300 = vmatmul.mubr.f32.gmra.mrb[0].mxu0 %v174
    %v301 = vpop.f32.mrb[0].mxu0
    %v302 = vadd.f32 %v109, %v301
    %v303 = vpop.f32.mrb[0].mxu0
    %304 = vmatprep.mubr.f32.mxu0 0.0
    %305 = vmatmul.mubr.f32.gmra.mrb[0].mxu0 %v177
    %v306 = vpop.f32.mrb[0].mxu0
    %v307 = vadd.f32 %v114, %v306
    %v308 = vpop.f32.mrb[0].mxu0
    %309 = vmatprep.mubr.f32.mxu0 0.0
    %310 = vmatmul.mubr.f32.gmra.mrb[0].mxu0 %v180
    %v311 = vpop.f32.mrb[0].mxu0
    %v312 = vadd.f32 %v119, %v311
    %v313 = vpop.f32.mrb[0].mxu0
    %314 = vmatprep.mubr.f32.mxu0 0.0
    %315 = vmatmul.mubr.f32.gmra.mrb[0].mxu0 %v183
    %v316 = vpop.f32.mrb[0].mxu0
    %v317 = vadd.f32 %v124, %v316
    %v318 = vpop.f32.mrb[0].mxu0
    %319 = vmatprep.mubr.f32.mxu0 0.0
    %320 = vmatmul.mubr.f32.gmra.mrb[0].mxu0 %v186
    %v321 = vpop.f32.mrb[0].mxu0
    %v322 = vadd.f32 %v129, %v321
    %v323 = vpop.f32.mrb[0].mxu0
    %324 = vmatprep.mubr.f32.mxu0 0.0
    %325 = vmatmul.mubr.f32.gmra.mrb[0].mxu0 %v189
    %v326 = vpop.f32.mrb[0].mxu0
    %v327 = vadd.f32 %v134, %v326
    %v328 = vpop.f32.mrb[0].mxu0
    %329 = vmatprep.mubr.f32.mxu0 0.0
    %330 = vmatmul.mubr.f32.gmra.mrb[0].mxu0 %v192
    %v331 = vpop.f32.mrb[0].mxu0
    %v332 = vadd.f32 %v139, %v331
    %v333 = vpop.f32.mrb[0].mxu0
    %334 = vmatprep.mubr.f32.mxu0 0.0
    %335 = vmatmul.mubr.f32.gmra.mrb[0].mxu0 %v195
    %v336 = vpop.f32.mrb[0].mxu0
    %v337 = vadd.f32 %v144, %v336
    %v338 = vpop.f32.mrb[0].mxu0
    %339 = vmatprep.mubr.f32.mxu0 0.0
    %340 = vmatmul.mubr.f32.gmra.mrb[0].mxu0 %v198
    %v341 = vpop.f32.mrb[0].mxu0
    %v342 = vadd.f32 %v149, %v341
    %v343 = vpop.f32.mrb[0].mxu0
    %344 = vdwg.mxu0
    %v345 = vmax.f32 %v267, 0.0
    %v346 = vmax.f32 %v272, 0.0
    %v347 = vmax.f32 %v277, 0.0
    %v348 = vmax.f32 %v282, 0.0
    %v349 = vmax.f32 %v287, 0.0
    %v350 = vmax.f32 %v292, 0.0
    %v351 = vmax.f32 %v297, 0.0
    %v352 = vmax.f32 %v302, 0.0
    %v353 = vmax.f32 %v307, 0.0
    %v354 = vmax.f32 %v312, 0.0
    %v355 = vmax.f32 %v317, 0.0
    %v356 = vmax.f32 %v322, 0.0
    %v357 = vmax.f32 %v327, 0.0
    %v358 = vmax.f32 %v332, 0.0
    %v359 = vmax.f32 %v337, 0.0
    %v360 = vmax.f32 %v342, 0.0
    %v361 = vld [vmem:[%s3] sm:$0xff]
    %v362 = vld [vmem:[%s3 + $0x8] sm:$0xff]
    %v363 = vld [vmem:[%s3 + $0x10] sm:$0xff]
    %v364 = vld [vmem:[%s3 + $0x18] sm:$0xff]
    %v365 = vld [vmem:[%s3 + $0x20] sm:$0xff]
    %v366 = vld [vmem:[%s3 + $0x28] sm:$0xff]
    %v367 = vld [vmem:[%s3 + $0x30] sm:$0xff]
    %v368 = vld [vmem:[%s3 + $0x38] sm:$0xff]
    %v369 = vld [vmem:[%s3 + $0x40] sm:$0xff]
    %v370 = vld [vmem:[%s3 + $0x48] sm:$0xff]
    %v371 = vld [vmem:[%s3 + $0x50] sm:$0xff]
    %v372 = vld [vmem:[%s3 + $0x58] sm:$0xff]
    %v373 = vld [vmem:[%s3 + $0x60] sm:$0xff]
    %v374 = vld [vmem:[%s3 + $0x68] sm:$0xff]
    %v375 = vld [vmem:[%s3 + $0x70] sm:$0xff]
    %v376 = vld [vmem:[%s3 + $0x78] sm:$0xff]
    %v377 = vld [vmem:[%s3 + $0x80] sm:$0xff]
    %v378 = vld [vmem:[%s3 + $0x88] sm:$0xff]
    %v379 = vld [vmem:[%s3 + $0x90] sm:$0xff]
    %v380 = vld [vmem:[%s3 + $0x98] sm:$0xff]
    %v381 = vld [vmem:[%s3 + $0xa0] sm:$0xff]
    %v382 = vld [vmem:[%s3 + $0xa8] sm:$0xff]
    %v383 = vld [vmem:[%s3 + $0xb0] sm:$0xff]
    %v384 = vld [vmem:[%s3 + $0xb8] sm:$0xff]
    %v385 = vld [vmem:[%s3 + $0xc0] sm:$0xff]
    %v386 = vld [vmem:[%s3 + $0xc8] sm:$0xff]
    %v387 = vld [vmem:[%s3 + $0xd0] sm:$0xff]
    %v388 = vld [vmem:[%s3 + $0xd8] sm:$0xff]
    %v389 = vld [vmem:[%s3 + $0xe0] sm:$0xff]
    %v390 = vld [vmem:[%s3 + $0xe8] sm:$0xff]
    %v391 = vld [vmem:[%s3 + $0xf0] sm:$0xff]
    %v392 = vld [vmem:[%s3 + $0xf8] sm:$0xff]
    %v393 = vld [vmem:[%s4] sm:$0xff]
    %v394 = vld [vmem:[%s4 + $0x8] sm:$0xff]
    %v395 = vld [vmem:[%s4 + $0x10] sm:$0xff]
    %v396 = vld [vmem:[%s4 + $0x18] sm:$0xff]
    %v397 = vld [vmem:[%s4 + $0x20] sm:$0xff]
    %v398 = vld [vmem:[%s4 + $0x28] sm:$0xff]
    %v399 = vld [vmem:[%s4 + $0x30] sm:$0xff]
    %v400 = vld [vmem:[%s4 + $0x38] sm:$0xff]
    %v401 = vld [vmem:[%s4 + $0x40] sm:$0xff]
    %v402 = vld [vmem:[%s4 + $0x48] sm:$0xff]
    %v403 = vld [vmem:[%s4 + $0x50] sm:$0xff]
    %v404 = vld [vmem:[%s4 + $0x58] sm:$0xff]
    %v405 = vld [vmem:[%s4 + $0x60] sm:$0xff]
    %v406 = vld [vmem:[%s4 + $0x68] sm:$0xff]
    %v407 = vld [vmem:[%s4 + $0x70] sm:$0xff]
    %v408 = vld [vmem:[%s4 + $0x78] sm:$0xff]
    %v409 = vld [vmem:[%s4 + $0x80] sm:$0xff]
    %v410 = vld [vmem:[%s4 + $0x88] sm:$0xff]
    %v411 = vld [vmem:[%s4 + $0x90] sm:$0xff]
    %v412 = vld [vmem:[%s4 + $0x98] sm:$0xff]
    %v413 = vld [vmem:[%s4 + $0xa0] sm:$0xff]
    %v414 = vld [vmem:[%s4 + $0xa8] sm:$0xff]
    %v415 = vld [vmem:[%s4 + $0xb0] sm:$0xff]
    %v416 = vld [vmem:[%s4 + $0xb8] sm:$0xff]
    %v417 = vld [vmem:[%s4 + $0xc0] sm:$0xff]
    %v418 = vld [vmem:[%s4 + $0xc8] sm:$0xff]
    %v419 = vld [vmem:[%s4 + $0xd0] sm:$0xff]
    %v420 = vld [vmem:[%s4 + $0xd8] sm:$0xff]
    %v421 = vld [vmem:[%s4 + $0xe0] sm:$0xff]
    %v422 = vld [vmem:[%s4 + $0xe8] sm:$0xff]
    %v423 = vld [vmem:[%s4 + $0xf0] sm:$0xff]
    %v424 = vld [vmem:[%s4 + $0xf8] sm:$0xff]
    %426 = vset.pattern.permute.xlu0 0
    %427 = vperm.xlu0 %426, %v393
    %v428 = vpop.permute.xlu0 %427
    %431 = vset.pattern.permute.xlu0 0
    %432 = vperm.xlu0 %431, %v394
    %v433 = vpop.permute.xlu0 %432
    %436 = vset.pattern.permute.xlu0 0
    %437 = vperm.xlu0 %436, %v395
    %v438 = vpop.permute.xlu0 %437
    %441 = vset.pattern.permute.xlu0 0
    %442 = vperm.xlu0 %441, %v396
    %v443 = vpop.permute.xlu0 %442
    %446 = vset.pattern.permute.xlu0 0
    %447 = vperm.xlu0 %446, %v397
    %v448 = vpop.permute.xlu0 %447
    %451 = vset.pattern.permute.xlu0 0
    %452 = vperm.xlu0 %451, %v398
    %v453 = vpop.permute.xlu0 %452
    %456 = vset.pattern.permute.xlu0 0
    %457 = vperm.xlu0 %456, %v399
    %v458 = vpop.permute.xlu0 %457
    %461 = vset.pattern.permute.xlu0 0
    %462 = vperm.xlu0 %461, %v400
    %v463 = vpop.permute.xlu0 %462
    %466 = vset.pattern.permute.xlu0 0
    %467 = vperm.xlu0 %466, %v401
    %v468 = vpop.permute.xlu0 %467
    %471 = vset.pattern.permute.xlu0 0
    %472 = vperm.xlu0 %471, %v402
    %v473 = vpop.permute.xlu0 %472
    %476 = vset.pattern.permute.xlu0 0
    %477 = vperm.xlu0 %476, %v403
    %v478 = vpop.permute.xlu0 %477
    %481 = vset.pattern.permute.xlu0 0
    %482 = vperm.xlu0 %481, %v404
    %v483 = vpop.permute.xlu0 %482
    %486 = vset.pattern.permute.xlu0 0
    %487 = vperm.xlu0 %486, %v405
    %v488 = vpop.permute.xlu0 %487
    %491 = vset.pattern.permute.xlu0 0
    %492 = vperm.xlu0 %491, %v406
    %v493 = vpop.permute.xlu0 %492
    %496 = vset.pattern.permute.xlu0 0
    %497 = vperm.xlu0 %496, %v407
    %v498 = vpop.permute.xlu0 %497
    %501 = vset.pattern.permute.xlu0 0
    %502 = vperm.xlu0 %501, %v408
    %v503 = vpop.permute.xlu0 %502
    %506 = vset.pattern.permute.xlu0 0
    %507 = vperm.xlu0 %506, %v409
    %v508 = vpop.permute.xlu0 %507
    %511 = vset.pattern.permute.xlu0 0
    %512 = vperm.xlu0 %511, %v410
    %v513 = vpop.permute.xlu0 %512
    %516 = vset.pattern.permute.xlu0 0
    %517 = vperm.xlu0 %516, %v411
    %v518 = vpop.permute.xlu0 %517
    %521 = vset.pattern.permute.xlu0 0
    %522 = vperm.xlu0 %521, %v412
    %v523 = vpop.permute.xlu0 %522
    %526 = vset.pattern.permute.xlu0 0
    %527 = vperm.xlu0 %526, %v413
    %v528 = vpop.permute.xlu0 %527
    %531 = vset.pattern.permute.xlu0 0
    %532 = vperm.xlu0 %531, %v414
    %v533 = vpop.permute.xlu0 %532
    %536 = vset.pattern.permute.xlu0 0
    %537 = vperm.xlu0 %536, %v415
    %v538 = vpop.permute.xlu0 %537
    %541 = vset.pattern.permute.xlu0 0
    %542 = vperm.xlu0 %541, %v416
    %v543 = vpop.permute.xlu0 %542
    %546 = vset.pattern.permute.xlu0 0
    %547 = vperm.xlu0 %546, %v417
    %v548 = vpop.permute.xlu0 %547
    %551 = vset.pattern.permute.xlu0 0
    %552 = vperm.xlu0 %551, %v418
    %v553 = vpop.permute.xlu0 %552
    %556 = vset.pattern.permute.xlu0 0
    %557 = vperm.xlu0 %556, %v419
    %v558 = vpop.permute.xlu0 %557
    %561 = vset.pattern.permute.xlu0 0
    %562 = vperm.xlu0 %561, %v420
    %v563 = vpop.permute.xlu0 %562
    %566 = vset.pattern.permute.xlu0 0
    %567 = vperm.xlu0 %566, %v421
    %v568 = vpop.permute.xlu0 %567
    %571 = vset.pattern.permute.xlu0 0
    %572 = vperm.xlu0 %571, %v422
    %v573 = vpop.permute.xlu0 %572
    %576 = vset.pattern.permute.xlu0 0
    %577 = vperm.xlu0 %576, %v423
    %v578 = vpop.permute.xlu0 %577
    %581 = vset.pattern.permute.xlu0 0
    %582 = vperm.xlu0 %581, %v424
    %v583 = vpop.permute.xlu0 %582
    %585 = vmatprep.subr.mxu0 0.0
    %586 = vmatpush1.msra.mxu0 %v345
    %587 = vmatprep.subr.mxu0 0.0
    %588 = vmatpush1.msra.mxu0 %v346
    %589 = vmatprep.subr.mxu0 0.0
    %590 = vmatpush1.msra.mxu0 %v347
    %591 = vmatprep.subr.mxu0 0.0
    %592 = vmatpush1.msra.mxu0 %v348
    %593 = vmatprep.subr.mxu0 0.0
    %594 = vmatpush1.msra.mxu0 %v349
    %595 = vmatprep.subr.mxu0 0.0
    %596 = vmatpush1.msra.mxu0 %v350
    %597 = vmatprep.subr.mxu0 0.0
    %598 = vmatpush1.msra.mxu0 %v351
    %599 = vmatprep.subr.mxu0 0.0
    %600 = vmatpush1.msra.mxu0 %v352
    %601 = vmatprep.subr.mxu0 0.0
    %602 = vmatpush1.msra.mxu0 %v353
    %603 = vmatprep.subr.mxu0 0.0
    %604 = vmatpush1.msra.mxu0 %v354
    %605 = vmatprep.subr.mxu0 0.0
    %606 = vmatpush1.msra.mxu0 %v355
    %607 = vmatprep.subr.mxu0 0.0
    %608 = vmatpush1.msra.mxu0 %v356
    %609 = vmatprep.subr.mxu0 0.0
    %610 = vmatpush1.msra.mxu0 %v357
    %611 = vmatprep.subr.mxu0 0.0
    %612 = vmatpush1.msra.mxu0 %v358
    %613 = vmatprep.subr.mxu0 0.0
    %614 = vmatpush1.msra.mxu0 %v359
    %615 = vmatprep.subr.mxu0 0.0
    %616 = vmatpush1.msra.mxu0 %v360
    %617 = vmatprep.subr.mxu0 0.0
    %618 = vmatpush1.msra.mxu0 0.0
    %619 = vmatprep.subr.mxu0 0.0
    %620 = vmatpush1.msra.mxu0 0.0
    %621 = vmatprep.subr.mxu0 0.0
    %622 = vmatpush1.msra.mxu0 0.0
    %623 = vmatprep.subr.mxu0 0.0
    %624 = vmatpush1.msra.mxu0 0.0
    %625 = vmatprep.subr.mxu0 0.0
    %626 = vmatpush1.msra.mxu0 0.0
    %627 = vmatprep.subr.mxu0 0.0
    %628 = vmatpush1.msra.mxu0 0.0
    %629 = vmatprep.subr.mxu0 0.0
    %630 = vmatpush1.msra.mxu0 0.0
    %631 = vmatprep.subr.mxu0 0.0
    %632 = vmatpush1.msra.mxu0 0.0
    %633 = vmatprep.subr.mxu0 0.0
    %634 = vmatpush1.msra.mxu0 0.0
    %635 = vmatprep.subr.mxu0 0.0
    %636 = vmatpush1.msra.mxu0 0.0
    %637 = vmatprep.subr.mxu0 0.0
    %638 = vmatpush1.msra.mxu0 0.0
    %639 = vmatprep.subr.mxu0 0.0
    %640 = vmatpush1.msra.mxu0 0.0
    %641 = vmatprep.subr.mxu0 0.0
    %642 = vmatpush1.msra.mxu0 0.0
    %643 = vmatprep.subr.mxu0 0.0
    %644 = vmatpush1.msra.mxu0 0.0
    %645 = vmatprep.subr.mxu0 0.0
    %646 = vmatpush1.msra.mxu0 0.0
    %647 = vmatprep.subr.mxu0 0.0
    %648 = vmatpush1.msra.mxu0 0.0
    %649 = vmatprep.mubr.f32.mxu0 0.0
    %650 = vmatmul.mubr.f32.gmra.mrb[0].mxu0 %v361
    %v651 = vpop.f32.mrb[0].mxu0
    %v652 = vadd.f32 %v428, %v651
    %v653 = vpop.f32.mrb[0].mxu0
    %654 = vmatprep.mubr.f32.mxu0 0.0
    %655 = vmatmul.mubr.f32.gmra.mrb[0].mxu0 %v362
    %v656 = vpop.f32.mrb[0].mxu0
    %v657 = vadd.f32 %v433, %v656
    %v658 = vpop.f32.mrb[0].mxu0
    %659 = vmatprep.mubr.f32.mxu0 0.0
    %660 = vmatmul.mubr.f32.gmra.mrb[0].mxu0 %v363
    %v661 = vpop.f32.mrb[0].mxu0
    %v662 = vadd.f32 %v438, %v661
    %v663 = vpop.f32.mrb[0].mxu0
    %664 = vmatprep.mubr.f32.mxu0 0.0
    %665 = vmatmul.mubr.f32.gmra.mrb[0].mxu0 %v364
    %v666 = vpop.f32.mrb[0].mxu0
    %v667 = vadd.f32 %v443, %v666
    %v668 = vpop.f32.mrb[0].mxu0
    %669 = vmatprep.mubr.f32.mxu0 0.0
    %670 = vmatmul.mubr.f32.gmra.mrb[0].mxu0 %v365
    %v671 = vpop.f32.mrb[0].mxu0
    %v672 = vadd.f32 %v448, %v671
    %v673 = vpop.f32.mrb[0].mxu0
    %674 = vmatprep.mubr.f32.mxu0 0.0
    %675 = vmatmul.mubr.f32.gmra.mrb[0].mxu0 %v366
    %v676 = vpop.f32.mrb[0].mxu0
    %v677 = vadd.f32 %v453, %v676
    %v678 = vpop.f32.mrb[0].mxu0
    %679 = vmatprep.mubr.f32.mxu0 0.0
    %680 = vmatmul.mubr.f32.gmra.mrb[0].mxu0 %v367
    %v681 = vpop.f32.mrb[0].mxu0
    %v682 = vadd.f32 %v458, %v681
    %v683 = vpop.f32.mrb[0].mxu0
    %684 = vmatprep.mubr.f32.mxu0 0.0
    %685 = vmatmul.mubr.f32.gmra.mrb[0].mxu0 %v368
    %v686 = vpop.f32.mrb[0].mxu0
    %v687 = vadd.f32 %v463, %v686
    %v688 = vpop.f32.mrb[0].mxu0
    %689 = vmatprep.mubr.f32.mxu0 0.0
    %690 = vmatmul.mubr.f32.gmra.mrb[0].mxu0 %v369
    %v691 = vpop.f32.mrb[0].mxu0
    %v692 = vadd.f32 %v468, %v691
    %v693 = vpop.f32.mrb[0].mxu0
    %694 = vmatprep.mubr.f32.mxu0 0.0
    %695 = vmatmul.mubr.f32.gmra.mrb[0].mxu0 %v370
    %v696 = vpop.f32.mrb[0].mxu0
    %v697 = vadd.f32 %v473, %v696
    %v698 = vpop.f32.mrb[0].mxu0
    %699 = vmatprep.mubr.f32.mxu0 0.0
    %700 = vmatmul.mubr.f32.gmra.mrb[0].mxu0 %v371
    %v701 = vpop.f32.mrb[0].mxu0
    %v702 = vadd.f32 %v478, %v701
    %v703 = vpop.f32.mrb[0].mxu0
    %704 = vmatprep.mubr.f32.mxu0 0.0
    %705 = vmatmul.mubr.f32.gmra.mrb[0].mxu0 %v372
    %v706 = vpop.f32.mrb[0].mxu0
    %v707 = vadd.f32 %v483, %v706
    %v708 = vpop.f32.mrb[0].mxu0
    %709 = vmatprep.mubr.f32.mxu0 0.0
    %710 = vmatmul.mubr.f32.gmra.mrb[0].mxu0 %v373
    %v711 = vpop.f32.mrb[0].mxu0
    %v712 = vadd.f32 %v488, %v711
    %v713 = vpop.f32.mrb[0].mxu0
    %714 = vmatprep.mubr.f32.mxu0 0.0
    %715 = vmatmul.mubr.f32.gmra.mrb[0].mxu0 %v374
    %v716 = vpop.f32.mrb[0].mxu0
    %v717 = vadd.f32 %v493, %v716
    %v718 = vpop.f32.mrb[0].mxu0
    %719 = vmatprep.mubr.f32.mxu0 0.0
    %720 = vmatmul.mubr.f32.gmra.mrb[0].mxu0 %v375
    %v721 = vpop.f32.mrb[0].mxu0
    %v722 = vadd.f32 %v498, %v721
    %v723 = vpop.f32.mrb[0].mxu0
    %724 = vmatprep.mubr.f32.mxu0 0.0
    %725 = vmatmul.mubr.f32.gmra.mrb[0].mxu0 %v376
    %v726 = vpop.f32.mrb[0].mxu0
    %v727 = vadd.f32 %v503, %v726
    %v728 = vpop.f32.mrb[0].mxu0
    %729 = vmatprep.mubr.f32.mxu0 0.0
    %730 = vmatmul.mubr.f32.gmra.mrb[0].mxu0 %v377
    %v731 = vpop.f32.mrb[0].mxu0
    %v732 = vadd.f32 %v508, %v731
    %v733 = vpop.f32.mrb[0].mxu0
    %734 = vmatprep.mubr.f32.mxu0 0.0
    %735 = vmatmul.mubr.f32.gmra.mrb[0].mxu0 %v378
    %v736 = vpop.f32.mrb[0].mxu0
    %v737 = vadd.f32 %v513, %v736
    %v738 = vpop.f32.mrb[0].mxu0
    %739 = vmatprep.mubr.f32.mxu0 0.0
    %740 = vmatmul.mubr.f32.gmra.mrb[0].mxu0 %v379
    %v741 = vpop.f32.mrb[0].mxu0
    %v742 = vadd.f32 %v518, %v741
    %v743 = vpop.f32.mrb[0].mxu0
    %744 = vmatprep.mubr.f32.mxu0 0.0
    %745 = vmatmul.mubr.f32.gmra.mrb[0].mxu0 %v380
    %v746 = vpop.f32.mrb[0].mxu0
    %v747 = vadd.f32 %v523, %v746
    %v748 = vpop.f32.mrb[0].mxu0
    %749 = vmatprep.mubr.f32.mxu0 0.0
    %750 = vmatmul.mubr.f32.gmra.mrb[0].mxu0 %v381
    %v751 = vpop.f32.mrb[0].mxu0
    %v752 = vadd.f32 %v528, %v751
    %v753 = vpop.f32.mrb[0].mxu0
    %754 = vmatprep.mubr.f32.mxu0 0.0
    %755 = vmatmul.mubr.f32.gmra.mrb[0].mxu0 %v382
    %v756 = vpop.f32.mrb[0].mxu0
    %v757 = vadd.f32 %v533, %v756
    %v758 = vpop.f32.mrb[0].mxu0
    %759 = vmatprep.mubr.f32.mxu0 0.0
    %760 = vmatmul.mubr.f32.gmra.mrb[0].mxu0 %v383
    %v761 = vpop.f32.mrb[0].mxu0
    %v762 = vadd.f32 %v538, %v761
    %v763 = vpop.f32.mrb[0].mxu0
    %764 = vmatprep.mubr.f32.mxu0 0.0
    %765 = vmatmul.mubr.f32.gmra.mrb[0].mxu0 %v384
    %v766 = vpop.f32.mrb[0].mxu0
    %v767 = vadd.f32 %v543, %v766
    %v768 = vpop.f32.mrb[0].mxu0
    %769 = vmatprep.mubr.f32.mxu0 0.0
    %770 = vmatmul.mubr.f32.gmra.mrb[0].mxu0 %v385
    %v771 = vpop.f32.mrb[0].mxu0
    %v772 = vadd.f32 %v548, %v771
    %v773 = vpop.f32.mrb[0].mxu0
    %774 = vmatprep.mubr.f32.mxu0 0.0
    %775 = vmatmul.mubr.f32.gmra.mrb[0].mxu0 %v386
    %v776 = vpop.f32.mrb[0].mxu0
    %v777 = vadd.f32 %v553, %v776
    %v778 = vpop.f32.mrb[0].mxu0
    %779 = vmatprep.mubr.f32.mxu0 0.0
    %780 = vmatmul.mubr.f32.gmra.mrb[0].mxu0 %v387
    %v781 = vpop.f32.mrb[0].mxu0
    %v782 = vadd.f32 %v558, %v781
    %v783 = vpop.f32.mrb[0].mxu0
    %784 = vmatprep.mubr.f32.mxu0 0.0
    %785 = vmatmul.mubr.f32.gmra.mrb[0].mxu0 %v388
    %v786 = vpop.f32.mrb[0].mxu0
    %v787 = vadd.f32 %v563, %v786
    %v788 = vpop.f32.mrb[0].mxu0
    %789 = vmatprep.mubr.f32.mxu0 0.0
    %790 = vmatmul.mubr.f32.gmra.mrb[0].mxu0 %v389
    %v791 = vpop.f32.mrb[0].mxu0
    %v792 = vadd.f32 %v568, %v791
    %v793 = vpop.f32.mrb[0].mxu0
    %794 = vmatprep.mubr.f32.mxu0 0.0
    %795 = vmatmul.mubr.f32.gmra.mrb[0].mxu0 %v390
    %v796 = vpop.f32.mrb[0].mxu0
    %v797 = vadd.f32 %v573, %v796
    %v798 = vpop.f32.mrb[0].mxu0
    %799 = vmatprep.mubr.f32.mxu0 0.0
    %800 = vmatmul.mubr.f32.gmra.mrb[0].mxu0 %v391
    %v801 = vpop.f32.mrb[0].mxu0
    %v802 = vadd.f32 %v578, %v801
    %v803 = vpop.f32.mrb[0].mxu0
    %804 = vmatprep.mubr.f32.mxu0 0.0
    %805 = vmatmul.mubr.f32.gmra.mrb[0].mxu0 %v392
    %v806 = vpop.f32.mrb[0].mxu0
    %v807 = vadd.f32 %v583, %v806
    %v808 = vpop.f32.mrb[0].mxu0
    %809 = vdwg.mxu0
    %v810 = vmax.f32 %v652, 0.0
    %v811 = vmax.f32 %v657, 0.0
    %v812 = vmax.f32 %v662, 0.0
    %v813 = vmax.f32 %v667, 0.0
    %v814 = vmax.f32 %v672, 0.0
    %v815 = vmax.f32 %v677, 0.0
    %v816 = vmax.f32 %v682, 0.0
    %v817 = vmax.f32 %v687, 0.0
    %v818 = vmax.f32 %v692, 0.0
    %v819 = vmax.f32 %v697, 0.0
    %v820 = vmax.f32 %v702, 0.0
    %v821 = vmax.f32 %v707, 0.0
    %v822 = vmax.f32 %v712, 0.0
    %v823 = vmax.f32 %v717, 0.0
    %v824 = vmax.f32 %v722, 0.0
    %v825 = vmax.f32 %v727, 0.0
    %v826 = vmax.f32 %v732, 0.0
    %v827 = vmax.f32 %v737, 0.0
    %v828 = vmax.f32 %v742, 0.0
    %v829 = vmax.f32 %v747, 0.0
    %v830 = vmax.f32 %v752, 0.0
    %v831 = vmax.f32 %v757, 0.0
    %v832 = vmax.f32 %v762, 0.0
    %v833 = vmax.f32 %v767, 0.0
    %v834 = vmax.f32 %v772, 0.0
    %v835 = vmax.f32 %v777, 0.0
    %v836 = vmax.f32 %v782, 0.0
    %v837 = vmax.f32 %v787, 0.0
    %v838 = vmax.f32 %v792, 0.0
    %v839 = vmax.f32 %v797, 0.0
    %v840 = vmax.f32 %v802, 0.0
    %v841 = vmax.f32 %v807, 0.0
    %v842 = vld [vmem:[%s5] sm:$0xff]
    %v843 = vld [vmem:[%s5 + $0x8] sm:$0xff]
    %v844 = vld [vmem:[%s5 + $0x10] sm:$0xff]
    %v845 = vld [vmem:[%s5 + $0x18] sm:$0xff]
    %v846 = vld [vmem:[%s5 + $0x20] sm:$0xff]
    %v847 = vld [vmem:[%s5 + $0x28] sm:$0xff]
    %v848 = vld [vmem:[%s5 + $0x30] sm:$0xff]
    %v849 = vld [vmem:[%s5 + $0x38] sm:$0xff]
    %v850 = vld [vmem:[%s5 + $0x40] sm:$0xff]
    %v851 = vld [vmem:[%s5 + $0x48] sm:$0xff]
    %v852 = vld [vmem:[%s5 + $0x50] sm:$0xff]
    %v853 = vld [vmem:[%s5 + $0x58] sm:$0xff]
    %v854 = vld [vmem:[%s5 + $0x60] sm:$0xff]
    %v855 = vld [vmem:[%s5 + $0x68] sm:$0xff]
    %v856 = vld [vmem:[%s5 + $0x70] sm:$0xff]
    %v857 = vld [vmem:[%s5 + $0x78] sm:$0xff]
    %v858 = vld [vmem:[%s6] sm:$0xff]
    %v859 = vld [vmem:[%s6 + $0x8] sm:$0xff]
    %v860 = vld [vmem:[%s6 + $0x10] sm:$0xff]
    %v861 = vld [vmem:[%s6 + $0x18] sm:$0xff]
    %v862 = vld [vmem:[%s6 + $0x20] sm:$0xff]
    %v863 = vld [vmem:[%s6 + $0x28] sm:$0xff]
    %v864 = vld [vmem:[%s6 + $0x30] sm:$0xff]
    %v865 = vld [vmem:[%s6 + $0x38] sm:$0xff]
    %867 = vset.pattern.permute.xlu0 0
    %868 = vperm.xlu0 %867, %v858
    %v869 = vpop.permute.xlu0 %868
    %872 = vset.pattern.permute.xlu0 0
    %873 = vperm.xlu0 %872, %v859
    %v874 = vpop.permute.xlu0 %873
    %877 = vset.pattern.permute.xlu0 0
    %878 = vperm.xlu0 %877, %v860
    %v879 = vpop.permute.xlu0 %878
    %882 = vset.pattern.permute.xlu0 0
    %883 = vperm.xlu0 %882, %v861
    %v884 = vpop.permute.xlu0 %883
    %887 = vset.pattern.permute.xlu0 0
    %888 = vperm.xlu0 %887, %v862
    %v889 = vpop.permute.xlu0 %888
    %892 = vset.pattern.permute.xlu0 0
    %893 = vperm.xlu0 %892, %v863
    %v894 = vpop.permute.xlu0 %893
    %897 = vset.pattern.permute.xlu0 0
    %898 = vperm.xlu0 %897, %v864
    %v899 = vpop.permute.xlu0 %898
    %902 = vset.pattern.permute.xlu0 0
    %903 = vperm.xlu0 %902, %v865
    %v904 = vpop.permute.xlu0 %903
    %906 = vmatprep.subr.mxu0 0.0
    %907 = vmatpush1.msra.mxu0 %v810
    %908 = vmatprep.subr.mxu0 0.0
    %909 = vmatpush1.msra.mxu0 %v811
    %910 = vmatprep.subr.mxu0 0.0
    %911 = vmatpush1.msra.mxu0 %v812
    %912 = vmatprep.subr.mxu0 0.0
    %913 = vmatpush1.msra.mxu0 %v813
    %914 = vmatprep.subr.mxu0 0.0
    %915 = vmatpush1.msra.mxu0 %v814
    %916 = vmatprep.subr.mxu0 0.0
    %917 = vmatpush1.msra.mxu0 %v815
    %918 = vmatprep.subr.mxu0 0.0
    %919 = vmatpush1.msra.mxu0 %v816
    %920 = vmatprep.subr.mxu0 0.0
    %921 = vmatpush1.msra.mxu0 %v817
    %922 = vmatprep.subr.mxu0 0.0
    %923 = vmatpush1.msra.mxu0 %v818
    %924 = vmatprep.subr.mxu0 0.0
    %925 = vmatpush1.msra.mxu0 %v819
    %926 = vmatprep.subr.mxu0 0.0
    %927 = vmatpush1.msra.mxu0 %v820
    %928 = vmatprep.subr.mxu0 0.0
    %929 = vmatpush1.msra.mxu0 %v821
    %930 = vmatprep.subr.mxu0 0.0
    %931 = vmatpush1.msra.mxu0 %v822
    %932 = vmatprep.subr.mxu0 0.0
    %933 = vmatpush1.msra.mxu0 %v823
    %934 = vmatprep.subr.mxu0 0.0
    %935 = vmatpush1.msra.mxu0 %v824
    %936 = vmatprep.subr.mxu0 0.0
    %937 = vmatpush1.msra.mxu0 %v825
    %938 = vmatprep.subr.mxu0 0.0
    %939 = vmatpush1.msra.mxu0 %v826
    %940 = vmatprep.subr.mxu0 0.0
    %941 = vmatpush1.msra.mxu0 %v827
    %942 = vmatprep.subr.mxu0 0.0
    %943 = vmatpush1.msra.mxu0 %v828
    %944 = vmatprep.subr.mxu0 0.0
    %945 = vmatpush1.msra.mxu0 %v829
    %946 = vmatprep.subr.mxu0 0.0
    %947 = vmatpush1.msra.mxu0 %v830
    %948 = vmatprep.subr.mxu0 0.0
    %949 = vmatpush1.msra.mxu0 %v831
    %950 = vmatprep.subr.mxu0 0.0
    %951 = vmatpush1.msra.mxu0 %v832
    %952 = vmatprep.subr.mxu0 0.0
    %953 = vmatpush1.msra.mxu0 %v833
    %954 = vmatprep.subr.mxu0 0.0
    %955 = vmatpush1.msra.mxu0 %v834
    %956 = vmatprep.subr.mxu0 0.0
    %957 = vmatpush1.msra.mxu0 %v835
    %958 = vmatprep.subr.mxu0 0.0
    %959 = vmatpush1.msra.mxu0 %v836
    %960 = vmatprep.subr.mxu0 0.0
    %961 = vmatpush1.msra.mxu0 %v837
    %962 = vmatprep.subr.mxu0 0.0
    %963 = vmatpush1.msra.mxu0 %v838
    %964 = vmatprep.subr.mxu0 0.0
    %965 = vmatpush1.msra.mxu0 %v839
    %966 = vmatprep.subr.mxu0 0.0
    %967 = vmatpush1.msra.mxu0 %v840
    %968 = vmatprep.subr.mxu0 0.0
    %969 = vmatpush1.msra.mxu0 %v841
    %970 = vmatprep.mubr.f32.mxu0 %v843
    %971 = vmatmul.mubr.f32.gmra.mrb[0].mxu0 %v842
    %v972 = vpop.f32.mrb[0].mxu0
    %v973 = vadd.f32 %v869, %v972
    %v974 = vpop.f32.mrb[0].mxu0
    %975 = vmatprep.mubr.f32.mxu0 %v845
    %976 = vmatmul.mubr.f32.gmra.mrb[0].mxu0 %v844
    %v977 = vpop.f32.mrb[0].mxu0
    %v978 = vadd.f32 %v874, %v977
    %v979 = vpop.f32.mrb[0].mxu0
    %980 = vmatprep.mubr.f32.mxu0 %v847
    %981 = vmatmul.mubr.f32.gmra.mrb[0].mxu0 %v846
    %v982 = vpop.f32.mrb[0].mxu0
    %v983 = vadd.f32 %v879, %v982
    %v984 = vpop.f32.mrb[0].mxu0
    %985 = vmatprep.mubr.f32.mxu0 %v849
    %986 = vmatmul.mubr.f32.gmra.mrb[0].mxu0 %v848
    %v987 = vpop.f32.mrb[0].mxu0
    %v988 = vadd.f32 %v884, %v987
    %v989 = vpop.f32.mrb[0].mxu0
    %990 = vmatprep.mubr.f32.mxu0 %v851
    %991 = vmatmul.mubr.f32.gmra.mrb[0].mxu0 %v850
    %v992 = vpop.f32.mrb[0].mxu0
    %v993 = vadd.f32 %v889, %v992
    %v994 = vpop.f32.mrb[0].mxu0
    %995 = vmatprep.mubr.f32.mxu0 %v853
    %996 = vmatmul.mubr.f32.gmra.mrb[0].mxu0 %v852
    %v997 = vpop.f32.mrb[0].mxu0
    %v998 = vadd.f32 %v894, %v997
    %v999 = vpop.f32.mrb[0].mxu0
    %1000 = vmatprep.mubr.f32.mxu0 %v855
    %1001 = vmatmul.mubr.f32.gmra.mrb[0].mxu0 %v854
    %v1002 = vpop.f32.mrb[0].mxu0
    %v1003 = vadd.f32 %v899, %v1002
    %v1004 = vpop.f32.mrb[0].mxu0
    %1005 = vmatprep.mubr.f32.mxu0 %v857
    %1006 = vmatmul.mubr.f32.gmra.mrb[0].mxu0 %v856
    %v1007 = vpop.f32.mrb[0].mxu0
    %v1008 = vadd.f32 %v904, %v1007
    %v1009 = vpop.f32.mrb[0].mxu0
    %1010 = vdwg.mxu0
    %v1011 = vmax.f32 %v973, 0.0
    %v1012 = vmax.f32 %v978, 0.0
    %v1013 = vmax.f32 %v983, 0.0
    %v1014 = vmax.f32 %v988, 0.0
    %v1015 = vmax.f32 %v993, 0.0
    %v1016 = vmax.f32 %v998, 0.0
    %v1017 = vmax.f32 %v1003, 0.0
    %v1018 = vmax.f32 %v1008, 0.0
    %v1019 = vld [vmem:[%s7] sm:$0xff]
    %v1020 = vld [vmem:[%s7 + $0x8] sm:$0xff]
    %v1021 = vld [vmem:[%s7 + $0x10] sm:$0xff]
    %v1022 = vld [vmem:[%s7 + $0x18] sm:$0xff]
    %v1023 = vld [vmem:[%s7 + $0x20] sm:$0xff]
    %v1024 = vld [vmem:[%s7 + $0x28] sm:$0xff]
    %v1025 = vld [vmem:[%s7 + $0x30] sm:$0xff]
    %v1026 = vld [vmem:[%s7 + $0x38] sm:$0xff]
    %1028 = vset.pattern.permute.xlu0 0
    %1029 = vperm.xlu0 %1028, %v1019
    %v1030 = vpop.permute.xlu0 %1029
    %1033 = vset.pattern.permute.xlu0 0
    %1034 = vperm.xlu0 %1033, %v1020
    %v1035 = vpop.permute.xlu0 %1034
    %1038 = vset.pattern.permute.xlu0 0
    %1039 = vperm.xlu0 %1038, %v1021
    %v1040 = vpop.permute.xlu0 %1039
    %1043 = vset.pattern.permute.xlu0 0
    %1044 = vperm.xlu0 %1043, %v1022
    %v1045 = vpop.permute.xlu0 %1044
    %1048 = vset.pattern.permute.xlu0 0
    %1049 = vperm.xlu0 %1048, %v1023
    %v1050 = vpop.permute.xlu0 %1049
    %1053 = vset.pattern.permute.xlu0 0
    %1054 = vperm.xlu0 %1053, %v1024
    %v1055 = vpop.permute.xlu0 %1054
    %1058 = vset.pattern.permute.xlu0 0
    %1059 = vperm.xlu0 %1058, %v1025
    %v1060 = vpop.permute.xlu0 %1059
    %1063 = vset.pattern.permute.xlu0 0
    %1064 = vperm.xlu0 %1063, %v1026
    %v1065 = vpop.permute.xlu0 %1064
    %v1067 = vmul.f32 %v1011, %v1030
    %v1068 = vmul.f32 %v1012, %v1035
    %v1069 = vmul.f32 %v1013, %v1040
    %v1070 = vmul.f32 %v1014, %v1045
    %v1071 = vmul.f32 %v1015, %v1050
    %v1072 = vmul.f32 %v1016, %v1055
    %v1073 = vmul.f32 %v1017, %v1060
    %v1074 = vmul.f32 %v1018, %v1065
    %v1075 = vadd.f32 %v1067, %v1068
    %v1076 = vadd.f32 %v1075, %v1069
    %v1077 = vadd.f32 %v1076, %v1070
    %v1078 = vadd.f32 %v1077, %v1071
    %v1079 = vadd.f32 %v1078, %v1072
    %v1080 = vadd.f32 %v1079, %v1073
    %v1081 = vadd.f32 %v1080, %v1074
    %v1082 = vrot.slane %v1081, 4
    %v1083 = vadd.f32 %v1081, %v1082
    %v1084 = vrot.slane %v1083, 2
    %v1085 = vadd.f32 %v1083, %v1084
    %v1086 = vrot.slane %v1085, 1
    %v1087 = vadd.f32 %v1085, %v1086
    %v1088 = vld [vmem:[#allocation2] sm:$0x1]
    %1090 = vset.pattern.permute.xlu0 0
    %1091 = vperm.xlu0 %1090, %v1088
    %v1092 = vpop.permute.xlu0 %1091
    %v1094 = vlaneseq
    %v1095 = vshrl.u32 %v1094, 7
    %v1096 = vsub.s32 0, %v1095
    %v1097 = vrot.slane %v1092, %v1096
    %v1098 = vadd.f32 %v1087, %v1097
    %1099 = vst [vmem:[#allocation3] sm:$0x1] %v1098
    // Predicated region
    $region38: #{tpu_custom_call.1} parent=1 // pred_check
      _
    $region39: #{tpu_custom_call.1} parent=1 // pred_check_branch
      %1101 = sbr.rel (0) target = $region41
    $region40: #{tpu_custom_call.1} parent=1 // pred_region
      %s1103 = ssub.s32 16, 16
      %1104 = vsyncadd [#allocation4], %s1103
      %s1106 = sshll.u32 [#allocation3], 4
      %s1107 = int_to_ptr.vmem [resolvable:$true] %s1106
      %1109 = dma.vmem_to_hbm [thread:$0]  %s1107, 16, %s9, [#allocation4]
    $region41: #{tpu_custom_call.1} parent=1 // pred_fallthru
      _
    // Predicated region
    $region42: #{tpu_custom_call.1} parent=1 // pred_check
      _
    $region43: #{tpu_custom_call.1} parent=1 // pred_check_branch
      %1111 = sbr.rel (0) target = $region45
    $region44: #{tpu_custom_call.1} parent=1 // pred_region
      %1112 = dma.done [#allocation4], 16
    $region45: #{tpu_custom_call.1} parent=1 // pred_fallthru
      _
    %1113 = vsyncpa [#allocation4], 1

</llo_original>
